<compile_context>
chip_gen: v6e
topology: v6e:2x2x1
jax: 0.10.0
libtpu: 0.0.40
codegen_flags: <defaults>
</compile_context>

<pallas_src>
import jax
import jax.numpy as jnp
from jax.experimental import pallas as pl
from jax.experimental.pallas import tpu as pltpu


# ----------------------------------------------------------------------------
# Fused kernel: health_net + prescription_net + rec_loss + DDI batch_neg.
#   h3   : (3, 2E)  rows = [h_cur, h_last, h_cur - h_last]
#   bh3  : (3, E)   rows = [bh, bh, 0]   (residual row gets no bias)
#   adj  : (V, V)   DDI adjacency
# Outputs:
#   drug      : (3, V)  rows = [drug_rep, drug_rep_last, drug_residual_rep]
#   rec_loss  : (1, 1)
#   batch_neg : (1, 1)
# ----------------------------------------------------------------------------
def micron_fused_kernel(h3_ref, wh_ref, bh3_ref, w1_ref, b1_ref, w2_ref, b2_ref,
                        adj_ref, drug_ref, recloss_ref, batchneg_ref):
    # health_net (Linear 2E -> E); residual already folded into the 3-row batch.
    hr = jnp.dot(h3_ref[...], wh_ref[...],
                 preferred_element_type=jnp.float32) + bh3_ref[...]          # (3, E)

    # prescription_net: Linear E -> 4E, ReLU, Linear 4E -> V.
    hid = jnp.dot(hr, w1_ref[...], preferred_element_type=jnp.float32) + b1_ref[...]
    hid = jnp.maximum(hid, 0.0)                                              # (3, 4E)
    drug = jnp.dot(hid, w2_ref[...], preferred_element_type=jnp.float32) + b2_ref[...]  # (3, V)
    drug_ref[...] = drug

    inv_v = 1.0 / adj_ref.shape[0]

    # rec_loss = (1/V) * sum((sigmoid(d) - sigmoid(d_last + d_resid))^2)
    s_cur = jax.nn.sigmoid(drug[0:1, :])                                     # (1, V)
    s_oth = jax.nn.sigmoid(drug[1:2, :] + drug[2:3, :])                      # (1, V)
    recloss_ref[...] = jnp.sum((s_cur - s_oth) ** 2, axis=-1, keepdims=True) * inv_v

    # batch_neg = (1/V) * sum_ij p_i p_j A_ij  ==  (1/V) * sum((p @ A) * p)
    t = jnp.dot(s_cur, adj_ref[...], preferred_element_type=jnp.float32)     # (1, V)
    batchneg_ref[...] = jnp.sum(t * s_cur, axis=-1, keepdims=True) * inv_v


def micron_fused(h3, wh, bh3, w1, b1, w2, b2, ddi_adj):
    V = w2.shape[1]
    vmem = pl.BlockSpec(memory_space=pltpu.MemorySpace.VMEM)
    drug, rec_loss, batch_neg = pl.pallas_call(
        micron_fused_kernel,
        out_shape=(jax.ShapeDtypeStruct((3, V), jnp.float32),
                   jax.ShapeDtypeStruct((1, 1), jnp.float32),
                   jax.ShapeDtypeStruct((1, 1), jnp.float32)),
        in_specs=[vmem] * 8,
        out_specs=(vmem, vmem, vmem),
    )(h3, wh, bh3, w1, b1, w2, b2, ddi_adj)
    return drug, rec_loss[0, 0], batch_neg[0, 0]


# ----------------------------------------------------------------------------
# Full MICRON forward (embedding gather/sum glue in JAX, hot path in Pallas).
# ----------------------------------------------------------------------------
def micron_forward(params, ddi_adj, visits):
    emb0, emb1, wh, bh, w1, b1, w2, b2 = params

    def sum_emb(table, codes):
        idx = jnp.asarray(codes, dtype=jnp.int32)
        # == embedding(codes[None]).sum(dim=1) -> (1, E)
        return jnp.sum(table[idx], axis=0, keepdims=True)

    diag_emb = sum_emb(emb0, visits[-1][0])
    prod_emb = sum_emb(emb1, visits[-1][1])
    if len(visits) < 2:
        diag_emb_last = jnp.zeros_like(diag_emb)
        prod_emb_last = jnp.zeros_like(prod_emb)   # matches reference (diag_emb * 0)
    else:
        diag_emb_last = sum_emb(emb0, visits[-2][0])
        prod_emb_last = sum_emb(emb1, visits[-2][1])

    h_cur = jnp.concatenate([diag_emb, prod_emb], axis=-1)              # (1, 2E)
    h_last = jnp.concatenate([diag_emb_last, prod_emb_last], axis=-1)   # (1, 2E)
    # 3-row batch [cur, last, cur - last]; residual bias row is zero so the
    # health_net bias cancels exactly as in the reference residual.
    h3 = jnp.concatenate([h_cur, h_last, h_cur - h_last], axis=0).astype(jnp.float32)
    bh3 = jnp.concatenate([bh, bh, jnp.zeros_like(bh)], axis=0).astype(jnp.float32)

    drug, rec_loss, batch_neg = micron_fused(h3, wh, bh3, w1, b1, w2, b2, ddi_adj)
    drug_rep = drug[0:1, :]
    drug_rep_last = drug[1:2, :]
    drug_residual_rep = drug[2:3, :]
    return drug_rep, drug_rep_last, drug_residual_rep, batch_neg, rec_loss


# ----------------------------------------------------------------------------
# Pure-JAX reference for a sanity check.
# ----------------------------------------------------------------------------
def micron_reference(params, ddi_adj, visits):
    emb0, emb1, wh, bh, w1, b1, w2, b2 = params

    def sum_emb(table, codes):
        return jnp.sum(table[jnp.asarray(codes, jnp.int32)], axis=0, keepdims=True)

    h_cur = jnp.concatenate([sum_emb(emb0, visits[-1][0]),
                             sum_emb(emb1, visits[-1][1])], axis=-1)
    h_last = jnp.concatenate([sum_emb(emb0, visits[-2][0]),
                              sum_emb(emb1, visits[-2][1])], axis=-1)
    hr = h_cur @ wh + bh
    hrl = h_last @ wh + bh
    hres = hr - hrl

    def presc(x):
        return jnp.maximum(x @ w1 + b1, 0.0) @ w2 + b2

    d, dl, dr = presc(hr), presc(hrl), presc(hres)
    V = ddi_adj.shape[0]
    rec_loss = jnp.sum((jax.nn.sigmoid(d) - jax.nn.sigmoid(dl + dr)) ** 2) / V
    p = jax.nn.sigmoid(d)
    batch_neg = jnp.sum((p.T * p) * ddi_adj) / V
    return d, dl, dr, batch_neg, rec_loss


if __name__ == "__main__":
    emb_dim = 64
    vocab_size = (32, 32, 128)     # (diag vocab, proc vocab, drug vocab)
    V = vocab_size[2]

    key = jax.random.PRNGKey(0)
    ks = jax.random.split(key, 10)

    # Deterministic parameter init (shapes per MICRON.__init__; Linear stored as (in, out)).
    emb0 = jax.random.uniform(ks[0], (vocab_size[0], emb_dim), jnp.float32, -0.1, 0.1)
    emb1 = jax.random.uniform(ks[1], (vocab_size[1], emb_dim), jnp.float32, -0.1, 0.1)
    wh = jax.random.normal(ks[2], (2 * emb_dim, emb_dim), jnp.float32) * 0.05
    bh = jax.random.normal(ks[3], (1, emb_dim), jnp.float32) * 0.01
    w1 = jax.random.normal(ks[4], (emb_dim, 4 * emb_dim), jnp.float32) * 0.05
    b1 = jax.random.normal(ks[5], (1, 4 * emb_dim), jnp.float32) * 0.01
    w2 = jax.random.normal(ks[6], (4 * emb_dim, V), jnp.float32) * 0.05
    b2 = jax.random.normal(ks[7], (1, V), jnp.float32) * 0.01
    params = (emb0, emb1, wh, bh, w1, b1, w2, b2)

    # Symmetric 0/1 DDI adjacency with empty diagonal.
    r = jax.random.uniform(ks[8], (V, V), jnp.float32)
    adj = (r < 0.05).astype(jnp.float32)
    ddi_adj = jnp.clip(adj + adj.T, 0.0, 1.0) * (1.0 - jnp.eye(V, dtype=jnp.float32))

    # `input` = list of visits; each visit = [diag code list, proc code list].
    visits = [
        [[0, 3, 5], [1, 2]],          # older visit (input[-2])
        [[2, 4, 7, 9], [0, 1, 3]],    # current visit (input[-1])
    ]

    outs = micron_forward(params, ddi_adj, visits)
    outs = jax.block_until_ready(outs)
    drug_rep, drug_rep_last, drug_residual_rep, batch_neg, rec_loss = outs

    # Sanity check against a pure-JAX reference.
    ref = micron_reference(params, ddi_adj, visits)
    for got, want in zip(outs, ref):
        assert jnp.allclose(jnp.asarray(got), jnp.asarray(want), rtol=1e-2, atol=1e-3), \
            (got, want)

    assert drug_rep.shape == (1, V)
    assert drug_rep_last.shape == (1, V)
    assert drug_residual_rep.shape == (1, V)
    print("KERNEL_OK")
</pallas_src>

<mosaic_0001>
module attributes {stable_mosaic.version = 11 : i64} {
  func.func @micron_fused_kernel(%arg0: memref<3x128xf32, #tpu.memory_space<vmem>>, %arg1: memref<128x64xf32, #tpu.memory_space<vmem>>, %arg2: memref<3x64xf32, #tpu.memory_space<vmem>>, %arg3: memref<64x256xf32, #tpu.memory_space<vmem>>, %arg4: memref<1x256xf32, #tpu.memory_space<vmem>>, %arg5: memref<256x128xf32, #tpu.memory_space<vmem>>, %arg6: memref<1x128xf32, #tpu.memory_space<vmem>>, %arg7: memref<128x128xf32, #tpu.memory_space<vmem>>, %arg8: memref<3x128xf32, #tpu.memory_space<vmem>>, %arg9: memref<1x1xf32, #tpu.memory_space<vmem>>, %arg10: memref<1x1xf32, #tpu.memory_space<vmem>>) attributes {dimension_semantics = [], scalar_prefetch = 0 : i64, scratch_operands = 0 : i64, tpu.core_type = #tpu.core_type<tc>} {
    %c0 = arith.constant 0 : index
    %c0_0 = arith.constant 0 : index
    %0 = vector.load %arg0[%c0, %c0_0] : memref<3x128xf32, #tpu.memory_space<vmem>>, vector<3x128xf32>
    %c0_1 = arith.constant 0 : index
    %c0_2 = arith.constant 0 : index
    %1 = vector.load %arg1[%c0_1, %c0_2] : memref<128x64xf32, #tpu.memory_space<vmem>>, vector<128x64xf32>
    %cst = arith.constant dense<0.000000e+00> : vector<3x64xf32>
    %2 = tpu.matmul %0, %1, %cst {dimension_numbers = #tpu.dot_dimension_numbers<[1], [0], [0], [1], [0, 0, 1, 1], [], []>} : vector<3x128xf32>, vector<128x64xf32>, vector<3x64xf32> -> vector<3x64xf32>
    %c0_3 = arith.constant 0 : index
    %c0_4 = arith.constant 0 : index
    %3 = vector.load %arg2[%c0_3, %c0_4] : memref<3x64xf32, #tpu.memory_space<vmem>>, vector<3x64xf32>
    %4 = arith.addf %2, %3 : vector<3x64xf32>
    %c0_5 = arith.constant 0 : index
    %c0_6 = arith.constant 0 : index
    %5 = vector.load %arg3[%c0_5, %c0_6] : memref<64x256xf32, #tpu.memory_space<vmem>>, vector<64x256xf32>
    %cst_7 = arith.constant dense<0.000000e+00> : vector<3x256xf32>
    %6 = tpu.matmul %4, %5, %cst_7 {dimension_numbers = #tpu.dot_dimension_numbers<[1], [0], [0], [1], [0, 0, 1, 1], [], []>} : vector<3x64xf32>, vector<64x256xf32>, vector<3x256xf32> -> vector<3x256xf32>
    %c0_8 = arith.constant 0 : index
    %c0_9 = arith.constant 0 : index
    %7 = vector.load %arg4[%c0_8, %c0_9] : memref<1x256xf32, #tpu.memory_space<vmem>>, vector<1x256xf32>
    %8 = vector.broadcast %7 : vector<1x256xf32> to vector<3x256xf32>
    %9 = arith.addf %6, %8 : vector<3x256xf32>
    %cst_10 = arith.constant 0.000000e+00 : f32
    %10 = vector.broadcast %cst_10 : f32 to vector<3x256xf32>
    %11 = arith.maximumf %9, %10 : vector<3x256xf32>
    %c0_11 = arith.constant 0 : index
    %c0_12 = arith.constant 0 : index
    %12 = vector.load %arg5[%c0_11, %c0_12] : memref<256x128xf32, #tpu.memory_space<vmem>>, vector<256x128xf32>
    %cst_13 = arith.constant dense<0.000000e+00> : vector<3x128xf32>
    %13 = tpu.matmul %11, %12, %cst_13 {dimension_numbers = #tpu.dot_dimension_numbers<[1], [0], [0], [1], [0, 0, 1, 1], [], []>} : vector<3x256xf32>, vector<256x128xf32>, vector<3x128xf32> -> vector<3x128xf32>
    %c0_14 = arith.constant 0 : index
    %c0_15 = arith.constant 0 : index
    %14 = vector.load %arg6[%c0_14, %c0_15] : memref<1x128xf32, #tpu.memory_space<vmem>>, vector<1x128xf32>
    %15 = vector.broadcast %14 : vector<1x128xf32> to vector<3x128xf32>
    %16 = arith.addf %13, %15 : vector<3x128xf32>
    %c0_16 = arith.constant 0 : index
    %c0_17 = arith.constant 0 : index
    %17 = vector.load %arg8[%c0_16, %c0_17] : memref<3x128xf32, #tpu.memory_space<vmem>>, vector<3x128xf32>
    tpu.vector_store %arg8[%c0_16, %c0_17], %16 {strides = array<i32>} : memref<3x128xf32, #tpu.memory_space<vmem>>, vector<3x128xf32>,
    %18 = vector.extract_strided_slice %16 {offsets = [0, 0], sizes = [1, 128], strides = [1, 1]} : vector<3x128xf32> to vector<1x128xf32>
    %19 = arith.negf %18 : vector<1x128xf32>
    %20 = math.exp %19 : vector<1x128xf32>
    %cst_18 = arith.constant 1.000000e+00 : f32
    %21 = vector.broadcast %cst_18 : f32 to vector<1x128xf32>
    %22 = arith.addf %21, %20 : vector<1x128xf32>
    %23 = arith.divf %21, %22 : vector<1x128xf32>
    %24 = vector.extract_strided_slice %16 {offsets = [1, 0], sizes = [1, 128], strides = [1, 1]} : vector<3x128xf32> to vector<1x128xf32>
    %25 = vector.extract_strided_slice %16 {offsets = [2, 0], sizes = [1, 128], strides = [1, 1]} : vector<3x128xf32> to vector<1x128xf32>
    %26 = arith.addf %24, %25 : vector<1x128xf32>
    %27 = arith.negf %26 : vector<1x128xf32>
    %28 = math.exp %27 : vector<1x128xf32>
    %cst_19 = arith.constant 1.000000e+00 : f32
    %29 = vector.broadcast %cst_19 : f32 to vector<1x128xf32>
    %30 = arith.addf %29, %28 : vector<1x128xf32>
    %31 = arith.divf %29, %30 : vector<1x128xf32>
    %32 = arith.subf %23, %31 : vector<1x128xf32>
    %33 = arith.mulf %32, %32 : vector<1x128xf32>
    %cst_20 = arith.constant dense<0.000000e+00> : vector<1xf32>
    %34 = vector.multi_reduction <add>, %33, %cst_20 [1] : vector<1x128xf32> to vector<1xf32>
    %35 = vector.shape_cast %34 : vector<1xf32> to vector<1x1xf32>
    %cst_21 = arith.constant 7.812500e-03 : f32
    %36 = vector.broadcast %cst_21 : f32 to vector<1x1xf32>
    %37 = arith.mulf %35, %36 : vector<1x1xf32>
    %c0_22 = arith.constant 0 : index
    %c0_23 = arith.constant 0 : index
    %38 = vector.load %arg9[%c0_22, %c0_23] : memref<1x1xf32, #tpu.memory_space<vmem>>, vector<1x1xf32>
    tpu.vector_store %arg9[%c0_22, %c0_23], %37 {strides = array<i32>} : memref<1x1xf32, #tpu.memory_space<vmem>>, vector<1x1xf32>,
    %c0_24 = arith.constant 0 : index
    %c0_25 = arith.constant 0 : index
    %39 = vector.load %arg7[%c0_24, %c0_25] : memref<128x128xf32, #tpu.memory_space<vmem>>, vector<128x128xf32>
    %cst_26 = arith.constant dense<0.000000e+00> : vector<1x128xf32>
    %40 = tpu.matmul %23, %39, %cst_26 {dimension_numbers = #tpu.dot_dimension_numbers<[1], [0], [0], [1], [0, 0, 1, 1], [], []>} : vector<1x128xf32>, vector<128x128xf32>, vector<1x128xf32> -> vector<1x128xf32>
    %41 = arith.mulf %40, %23 : vector<1x128xf32>
    %cst_27 = arith.constant dense<0.000000e+00> : vector<1xf32>
    %42 = vector.multi_reduction <add>, %41, %cst_27 [1] : vector<1x128xf32> to vector<1xf32>
    %43 = vector.shape_cast %42 : vector<1xf32> to vector<1x1xf32>
    %cst_28 = arith.constant 7.812500e-03 : f32
    %44 = vector.broadcast %cst_28 : f32 to vector<1x1xf32>
    %45 = arith.mulf %43, %44 : vector<1x1xf32>
    %c0_29 = arith.constant 0 : index
    %c0_30 = arith.constant 0 : index
    %46 = vector.load %arg10[%c0_29, %c0_30] : memref<1x1xf32, #tpu.memory_space<vmem>>, vector<1x1xf32>
    tpu.vector_store %arg10[%c0_29, %c0_30], %45 {strides = array<i32>} : memref<1x1xf32, #tpu.memory_space<vmem>>, vector<1x1xf32>,
    return
  }
}

</mosaic_0001>

<llo_original>
// kernel: tpu_custom_call.1
$region0: #{tpu_custom_call.1}
  #allocation0 [shape = 'u32[]', space=smem, size = 0x4, offset = 0x4, fixed_abs, tag = 'smem constant byte address 0x4 - core index']
  #allocation1 [shape = 'u32[144,128]{1,0:T(1,128)}', space=vmem, size = 0x12000, scoped, tag = 'internal scratch']
  %s0 = inlined_call_operand.vmem [shape: f32[3,128], index: 0, kind: input, shape index: {}]
  %s1 = inlined_call_operand.vmem [shape: f32[128,64], index: 1, kind: input, shape index: {}]
  %s2 = inlined_call_operand.vmem [shape: f32[3,64], index: 2, kind: input, shape index: {}]
  %s3 = inlined_call_operand.vmem [shape: f32[64,256], index: 3, kind: input, shape index: {}]
  %s4 = inlined_call_operand.vmem [shape: f32[1,256], index: 4, kind: input, shape index: {}]
  %s5 = inlined_call_operand.hbm [shape: f32[256,128], index: 5, kind: input, shape index: {}]
  %s6 = inlined_call_operand.vmem [shape: f32[1,128], index: 6, kind: input, shape index: {}]
  %s7 = inlined_call_operand.hbm [shape: f32[128,128], index: 7, kind: input, shape index: {}]
  %s8 = inlined_call_operand.hbm [shape: f32[3,128], index: 8, kind: output, shape index: {0}]
  %s9 = inlined_call_operand.hbm [shape: f32[1,1], index: 9, kind: output, shape index: {1}]
  %s10 = inlined_call_operand.hbm [shape: f32[1,1], index: 10, kind: output, shape index: {2}]
  %11 = xla_tuple %s8, %s9, %s10
  %s12 = sld [smem:[#allocation0]]
  $region66: #{tpu_custom_call.1} parent=0
    _
  %s14 = ssub.s32 1, %s12
  %s15 = scalar_select 0, %s14, %s12
  $region1: #{tpu_custom_call.1} parent=0
    #allocation2 [shape = 'u8[131072]{0}', space=vmem, size = 0x20000, scoped, tag = 'input window, operand 5, single buffered']
    #allocation3 [shape = 's32[1]{0}', space=sflag, size = 0x4, scoped, tag = 'scoped memory for tpu_custom_call.1']
    #allocation4 [shape = 's32[1]{0}', space=sflag, size = 0x4, scoped, tag = 'scoped memory for tpu_custom_call.1']
    #allocation5 [shape = 'u8[65536]{0}', space=vmem, size = 0x10000, scoped, tag = 'input window, operand 7, single buffered']
    #allocation6 [shape = 's32[1]{0}', space=sflag, size = 0x4, scoped, tag = 'scoped memory for tpu_custom_call.1']
    #allocation7 [shape = 'u8[2048]{0}', space=vmem, size = 0x800, scoped, tag = 'output window, operand 0, single buffered']
    #allocation8 [shape = 'u8[512]{0}', space=vmem, size = 0x400, scoped, tag = 'output window, operand 1, single buffered']
    #allocation9 [shape = 's32[1]{0}', space=sflag, size = 0x4, scoped, tag = 'scoped memory for tpu_custom_call.1']
    #allocation10 [shape = 'u8[512]{0}', space=vmem, size = 0x400, scoped, tag = 'output window, operand 2, single buffered']
    %16 = vsyncpa [#allocation3], 0
    %17 = vsyncpa [#allocation6], 0
    %18 = vsyncpa [#allocation4], 0
    %19 = vsyncpa [#allocation9], 0
    // Predicated region
    $region2: #{tpu_custom_call.1} parent=1 // pred_check
      _
    $region3: #{tpu_custom_call.1} parent=1 // pred_check_branch
      %21 = sbr.rel (0) target = $region5
    $region4: #{tpu_custom_call.1} parent=1 // pred_region
      _
    $region5: #{tpu_custom_call.1} parent=1 // pred_fallthru
      _
    // Predicated region
    $region6: #{tpu_custom_call.1} parent=1 // pred_check
      _
    $region7: #{tpu_custom_call.1} parent=1 // pred_check_branch
      %23 = sbr.rel (0) target = $region9
    $region8: #{tpu_custom_call.1} parent=1 // pred_region
      _
    $region9: #{tpu_custom_call.1} parent=1 // pred_fallthru
      _
    // Predicated region
    $region10: #{tpu_custom_call.1} parent=1 // pred_check
      _
    $region11: #{tpu_custom_call.1} parent=1 // pred_check_branch
      %25 = sbr.rel (0) target = $region13
    $region12: #{tpu_custom_call.1} parent=1 // pred_region
      _
    $region13: #{tpu_custom_call.1} parent=1 // pred_fallthru
      _
    // Predicated region
    $region14: #{tpu_custom_call.1} parent=1 // pred_check
      _
    $region15: #{tpu_custom_call.1} parent=1 // pred_check_branch
      %27 = sbr.rel (0) target = $region17
    $region16: #{tpu_custom_call.1} parent=1 // pred_region
      _
    $region17: #{tpu_custom_call.1} parent=1 // pred_fallthru
      _
    // Predicated region
    $region18: #{tpu_custom_call.1} parent=1 // pred_check
      _
    $region19: #{tpu_custom_call.1} parent=1 // pred_check_branch
      %29 = sbr.rel (0) target = $region21
    $region20: #{tpu_custom_call.1} parent=1 // pred_region
      _
    $region21: #{tpu_custom_call.1} parent=1 // pred_fallthru
      _
    // Predicated region
    $region22: #{tpu_custom_call.1} parent=1 // pred_check
      _
    $region23: #{tpu_custom_call.1} parent=1 // pred_check_branch
      %31 = sbr.rel (0) target = $region25
    $region24: #{tpu_custom_call.1} parent=1 // pred_region
      %s33 = ssub.s32 4096, 4096
      %34 = vsyncadd [#allocation3], %s33
      %s35 = sshll.u32 [#allocation2], 4
      %s36 = int_to_ptr.vmem [resolvable:$true] %s35
      %41 = dma.hbm_to_vmem [thread:$0]  %s5, 4096, %s36, [#allocation3], 128, 128, 8
    $region25: #{tpu_custom_call.1} parent=1 // pred_fallthru
      _
    // Predicated region
    $region26: #{tpu_custom_call.1} parent=1 // pred_check
      _
    $region27: #{tpu_custom_call.1} parent=1 // pred_check_branch
      %43 = sbr.rel (0) target = $region29
    $region28: #{tpu_custom_call.1} parent=1 // pred_region
      _
    $region29: #{tpu_custom_call.1} parent=1 // pred_fallthru
      _
    // Predicated region
    $region30: #{tpu_custom_call.1} parent=1 // pred_check
      _
    $region31: #{tpu_custom_call.1} parent=1 // pred_check_branch
      %45 = sbr.rel (0) target = $region33
    $region32: #{tpu_custom_call.1} parent=1 // pred_region
      %s47 = ssub.s32 2048, 2048
      %48 = vsyncadd [#allocation6], %s47
      %s49 = sshll.u32 [#allocation5], 4
      %s50 = int_to_ptr.vmem [resolvable:$true] %s49
      %55 = dma.hbm_to_vmem [thread:$0]  %s7, 2048, %s50, [#allocation6], 128, 128, 8
    $region33: #{tpu_custom_call.1} parent=1 // pred_fallthru
      _
    // Predicated region
    $region34: #{tpu_custom_call.1} parent=1 // pred_check
      _
    $region35: #{tpu_custom_call.1} parent=1 // pred_check_branch
      %57 = sbr.rel (0) target = $region37
    $region36: #{tpu_custom_call.1} parent=1 // pred_region
      %58 = dma.done [#allocation3], 4096
    $region37: #{tpu_custom_call.1} parent=1 // pred_fallthru
      _
    // Predicated region
    $region38: #{tpu_custom_call.1} parent=1 // pred_check
      _
    $region39: #{tpu_custom_call.1} parent=1 // pred_check_branch
      %60 = sbr.rel (0) target = $region41
    $region40: #{tpu_custom_call.1} parent=1 // pred_region
      %61 = dma.done [#allocation6], 2048
    $region41: #{tpu_custom_call.1} parent=1 // pred_fallthru
      _
    %v62 = vld [vmem:[%s0] sm:$0x7]
    %v63 = vld [vmem:[%s1] sm:$0xff]
    %v64 = vld [vmem:[%s1 + $0x8] sm:$0xff]
    %v65 = vld [vmem:[%s1 + $0x10] sm:$0xff]
    %v66 = vld [vmem:[%s1 + $0x18] sm:$0xff]
    %v67 = vld [vmem:[%s1 + $0x20] sm:$0xff]
    %v68 = vld [vmem:[%s1 + $0x28] sm:$0xff]
    %v69 = vld [vmem:[%s1 + $0x30] sm:$0xff]
    %v70 = vld [vmem:[%s1 + $0x38] sm:$0xff]
    %v71 = vld [vmem:[%s1 + $0x40] sm:$0xff]
    %v72 = vld [vmem:[%s1 + $0x48] sm:$0xff]
    %v73 = vld [vmem:[%s1 + $0x50] sm:$0xff]
    %v74 = vld [vmem:[%s1 + $0x58] sm:$0xff]
    %v75 = vld [vmem:[%s1 + $0x60] sm:$0xff]
    %v76 = vld [vmem:[%s1 + $0x68] sm:$0xff]
    %v77 = vld [vmem:[%s1 + $0x70] sm:$0xff]
    %v78 = vld [vmem:[%s1 + $0x78] sm:$0xff]
    %v79 = vld [vmem:[%s2] sm:$0x7]
    %80 = vmatprep.subr.mxu0 0.0
    %81 = vmatpush1.msra.mxu0 %v78
    %82 = vmatprep.subr.mxu0 0.0
    %83 = vmatpush1.msra.mxu0 %v77
    %84 = vmatprep.subr.mxu0 0.0
    %85 = vmatpush1.msra.mxu0 %v76
    %86 = vmatprep.subr.mxu0 0.0
    %87 = vmatpush1.msra.mxu0 %v75
    %88 = vmatprep.subr.mxu0 0.0
    %89 = vmatpush1.msra.mxu0 %v74
    %90 = vmatprep.subr.mxu0 0.0
    %91 = vmatpush1.msra.mxu0 %v73
    %92 = vmatprep.subr.mxu0 0.0
    %93 = vmatpush1.msra.mxu0 %v72
    %94 = vmatprep.subr.mxu0 0.0
    %95 = vmatpush1.msra.mxu0 %v71
    %96 = vmatprep.subr.mxu0 0.0
    %97 = vmatpush1.msra.mxu0 %v70
    %98 = vmatprep.subr.mxu0 0.0
    %99 = vmatpush1.msra.mxu0 %v69
    %100 = vmatprep.subr.mxu0 0.0
    %101 = vmatpush1.msra.mxu0 %v68
    %102 = vmatprep.subr.mxu0 0.0
    %103 = vmatpush1.msra.mxu0 %v67
    %104 = vmatprep.subr.mxu0 0.0
    %105 = vmatpush1.msra.mxu0 %v66
    %106 = vmatprep.subr.mxu0 0.0
    %107 = vmatpush1.msra.mxu0 %v65
    %108 = vmatprep.subr.mxu0 0.0
    %109 = vmatpush1.msra.mxu0 %v64
    %110 = vmatprep.subr.mxu0 0.0
    %111 = vmatpush1.msra.mxu0 %v63
    %112 = vmatprep.subr.mxu0 0.0
    %113 = vmatpush2.msra.mxu0 0.0
    %114 = vmatprep.subr.mxu0 0.0
    %115 = vmatpush2.msra.mxu0 0.0
    %116 = vmatprep.subr.mxu0 0.0
    %117 = vmatpush2.msra.mxu0 0.0
    %118 = vmatprep.subr.mxu0 0.0
    %119 = vmatpush2.msra.mxu0 0.0
    %120 = vmatprep.subr.mxu0 0.0
    %121 = vmatpush2.msra.mxu0 0.0
    %122 = vmatprep.subr.mxu0 0.0
    %123 = vmatpush2.msra.mxu0 0.0
    %124 = vmatprep.subr.mxu0 0.0
    %125 = vmatpush2.msra.mxu0 0.0
    %126 = vmatprep.subr.mxu0 0.0
    %127 = vmatpush2.msra.mxu0 0.0
    %128 = vmatprep.subr.mxu0 0.0
    %129 = vmatpush2.msra.mxu0 0.0
    %130 = vmatprep.subr.mxu0 0.0
    %131 = vmatpush2.msra.mxu0 0.0
    %132 = vmatprep.subr.mxu0 0.0
    %133 = vmatpush2.msra.mxu0 0.0
    %134 = vmatprep.subr.mxu0 0.0
    %135 = vmatpush2.msra.mxu0 0.0
    %136 = vmatprep.subr.mxu0 0.0
    %137 = vmatpush2.msra.mxu0 0.0
    %138 = vmatprep.subr.mxu0 0.0
    %139 = vmatpush2.msra.mxu0 0.0
    %140 = vmatprep.subr.mxu0 0.0
    %141 = vmatpush2.msra.mxu0 0.0
    %142 = vmatprep.subr.mxu0 0.0
    %143 = vmatpush2.msra.mxu0 0.0
    %144 = vmatprep.mubr.f32.mxu0 0.0
    %145 = vmatmul.mubr.f32.gmra.mxu0 %v62
    %v146 = vpop.f32.mrf.mxu0
    %v147 = vadd.f32 %v79, %v146
    %v148 = vpop.f32.mrf.mxu0
    %149 = vdwg.mxu0
    %v150 = vld [vmem:[%s3] sm:$0xff]
    %v151 = vld [vmem:[%s3 + $0x8] sm:$0xff]
    %v152 = vld [vmem:[%s3 + $0x10] sm:$0xff]
    %v153 = vld [vmem:[%s3 + $0x18] sm:$0xff]
    %v154 = vld [vmem:[%s3 + $0x20] sm:$0xff]
    %v155 = vld [vmem:[%s3 + $0x28] sm:$0xff]
    %v156 = vld [vmem:[%s3 + $0x30] sm:$0xff]
    %v157 = vld [vmem:[%s3 + $0x38] sm:$0xff]
    %v158 = vld [vmem:[%s3 + $0x40] sm:$0xff]
    %v159 = vld [vmem:[%s3 + $0x48] sm:$0xff]
    %v160 = vld [vmem:[%s3 + $0x50] sm:$0xff]
    %v161 = vld [vmem:[%s3 + $0x58] sm:$0xff]
    %v162 = vld [vmem:[%s3 + $0x60] sm:$0xff]
    %v163 = vld [vmem:[%s3 + $0x68] sm:$0xff]
    %v164 = vld [vmem:[%s3 + $0x70] sm:$0xff]
    %v165 = vld [vmem:[%s3 + $0x78] sm:$0xff]
    %v166 = vld [vmem:[%s4] sm:$0x3]
    %v168 = vlaneseq
    %v169 = vshrl.u32 %v168, 7
    %v170 = vsub.s32 0, %v169
    %v171 = vrot.slane %v166, %v170
    %v172 = vlaneseq
    %v173 = vshrl.u32 %v172, 7
    %v174 = vsub.s32 1, %v173
    %v175 = vrot.slane %v166, %v174
    %vm178 = vcmask 523264
    %v180 = vsel %vm178, %v147, 0
    %182 = vmatprep.subr.mxu0 0.0
    %183 = vmatpush1.msra.mxu0 0.0
    %184 = vmatprep.subr.mxu0 0.0
    %185 = vmatpush1.msra.mxu0 0.0
    %186 = vmatprep.subr.mxu0 0.0
    %187 = vmatpush1.msra.mxu0 0.0
    %188 = vmatprep.subr.mxu0 0.0
    %189 = vmatpush1.msra.mxu0 0.0
    %190 = vmatprep.subr.mxu0 0.0
    %191 = vmatpush1.msra.mxu0 0.0
    %192 = vmatprep.subr.mxu0 0.0
    %193 = vmatpush1.msra.mxu0 0.0
    %194 = vmatprep.subr.mxu0 0.0
    %195 = vmatpush1.msra.mxu0 0.0
    %196 = vmatprep.subr.mxu0 0.0
    %197 = vmatpush1.msra.mxu0 0.0
    %198 = vmatprep.subr.mxu0 %v165
    %199 = vmatpush1.msra.mxu0 %v164
    %200 = vmatprep.subr.mxu0 %v163
    %201 = vmatpush1.msra.mxu0 %v162
    %202 = vmatprep.subr.mxu0 %v161
    %203 = vmatpush1.msra.mxu0 %v160
    %204 = vmatprep.subr.mxu0 %v159
    %205 = vmatpush1.msra.mxu0 %v158
    %206 = vmatprep.subr.mxu0 %v157
    %207 = vmatpush1.msra.mxu0 %v156
    %208 = vmatprep.subr.mxu0 %v155
    %209 = vmatpush1.msra.mxu0 %v154
    %210 = vmatprep.subr.mxu0 %v153
    %211 = vmatpush1.msra.mxu0 %v152
    %212 = vmatprep.subr.mxu0 %v151
    %213 = vmatpush1.msra.mxu0 %v150
    %214 = vmatprep.subr.mxu0 0.0
    %215 = vmatpush2.msra.mxu0 0.0
    %216 = vmatprep.subr.mxu0 0.0
    %217 = vmatpush2.msra.mxu0 0.0
    %218 = vmatprep.subr.mxu0 0.0
    %219 = vmatpush2.msra.mxu0 0.0
    %220 = vmatprep.subr.mxu0 0.0
    %221 = vmatpush2.msra.mxu0 0.0
    %222 = vmatprep.subr.mxu0 0.0
    %223 = vmatpush2.msra.mxu0 0.0
    %224 = vmatprep.subr.mxu0 0.0
    %225 = vmatpush2.msra.mxu0 0.0
    %226 = vmatprep.subr.mxu0 0.0
    %227 = vmatpush2.msra.mxu0 0.0
    %228 = vmatprep.subr.mxu0 0.0
    %229 = vmatpush2.msra.mxu0 0.0
    %230 = vmatprep.subr.mxu0 0.0
    %231 = vmatpush2.msra.mxu0 0.0
    %232 = vmatprep.subr.mxu0 0.0
    %233 = vmatpush2.msra.mxu0 0.0
    %234 = vmatprep.subr.mxu0 0.0
    %235 = vmatpush2.msra.mxu0 0.0
    %236 = vmatprep.subr.mxu0 0.0
    %237 = vmatpush2.msra.mxu0 0.0
    %238 = vmatprep.subr.mxu0 0.0
    %239 = vmatpush2.msra.mxu0 0.0
    %240 = vmatprep.subr.mxu0 0.0
    %241 = vmatpush2.msra.mxu0 0.0
    %242 = vmatprep.subr.mxu0 0.0
    %243 = vmatpush2.msra.mxu0 0.0
    %244 = vmatprep.subr.mxu0 0.0
    %245 = vmatpush2.msra.mxu0 0.0
    %246 = vmatprep.mubr.f32.mxu0 0.0
    %247 = vmatmul.mubr.f32.gmra.mxu0 %v180
    %v248 = vpop.f32.mrf.mxu0
    %v249 = vadd.f32 %v171, %v248
    %v250 = vpop.f32.mrf.mxu0
    %v251 = vadd.f32 %v175, %v250
    %252 = vdwg.mxu0
    %v253 = vmax.f32 %v249, 0.0
    %v254 = vmax.f32 %v251, 0.0
    %v255 = vld [vmem:[#allocation2] sm:$0xff]
    %v256 = vld [vmem:[#allocation2 + $0x8] sm:$0xff]
    %v257 = vld [vmem:[#allocation2 + $0x10] sm:$0xff]
    %v258 = vld [vmem:[#allocation2 + $0x18] sm:$0xff]
    %v259 = vld [vmem:[#allocation2 + $0x20] sm:$0xff]
    %v260 = vld [vmem:[#allocation2 + $0x28] sm:$0xff]
    %v261 = vld [vmem:[#allocation2 + $0x30] sm:$0xff]
    %v262 = vld [vmem:[#allocation2 + $0x38] sm:$0xff]
    %v263 = vld [vmem:[#allocation2 + $0x40] sm:$0xff]
    %v264 = vld [vmem:[#allocation2 + $0x48] sm:$0xff]
    %v265 = vld [vmem:[#allocation2 + $0x50] sm:$0xff]
    %v266 = vld [vmem:[#allocation2 + $0x58] sm:$0xff]
    %v267 = vld [vmem:[#allocation2 + $0x60] sm:$0xff]
    %v268 = vld [vmem:[#allocation2 + $0x68] sm:$0xff]
    %v269 = vld [vmem:[#allocation2 + $0x70] sm:$0xff]
    %v270 = vld [vmem:[#allocation2 + $0x78] sm:$0xff]
    %v271 = vld [vmem:[#allocation2 + $0x80] sm:$0xff]
    %v272 = vld [vmem:[#allocation2 + $0x88] sm:$0xff]
    %v273 = vld [vmem:[#allocation2 + $0x90] sm:$0xff]
    %v274 = vld [vmem:[#allocation2 + $0x98] sm:$0xff]
    %v275 = vld [vmem:[#allocation2 + $0xa0] sm:$0xff]
    %v276 = vld [vmem:[#allocation2 + $0xa8] sm:$0xff]
    %v277 = vld [vmem:[#allocation2 + $0xb0] sm:$0xff]
    %v278 = vld [vmem:[#allocation2 + $0xb8] sm:$0xff]
    %v279 = vld [vmem:[#allocation2 + $0xc0] sm:$0xff]
    %v280 = vld [vmem:[#allocation2 + $0xc8] sm:$0xff]
    %v281 = vld [vmem:[#allocation2 + $0xd0] sm:$0xff]
    %v282 = vld [vmem:[#allocation2 + $0xd8] sm:$0xff]
    %v283 = vld [vmem:[#allocation2 + $0xe0] sm:$0xff]
    %v284 = vld [vmem:[#allocation2 + $0xe8] sm:$0xff]
    %v285 = vld [vmem:[#allocation2 + $0xf0] sm:$0xff]
    %v286 = vld [vmem:[#allocation2 + $0xf8] sm:$0xff]
    %v287 = vld [vmem:[%s6] sm:$0x1]
    %v289 = vlaneseq
    %v290 = vshrl.u32 %v289, 7
    %v291 = vsub.s32 0, %v290
    %v292 = vrot.slane %v287, %v291
    %294 = vmatprep.subr.mxu0 0.0
    %295 = vmatpush1.msra.mxu0 %v270
    %296 = vmatprep.subr.mxu0 0.0
    %297 = vmatpush1.msra.mxu0 %v269
    %298 = vmatprep.subr.mxu0 0.0
    %299 = vmatpush1.msra.mxu0 %v268
    %300 = vmatprep.subr.mxu0 0.0
    %301 = vmatpush1.msra.mxu0 %v267
    %302 = vmatprep.subr.mxu0 0.0
    %303 = vmatpush1.msra.mxu0 %v266
    %304 = vmatprep.subr.mxu0 0.0
    %305 = vmatpush1.msra.mxu0 %v265
    %306 = vmatprep.subr.mxu0 0.0
    %307 = vmatpush1.msra.mxu0 %v264
    %308 = vmatprep.subr.mxu0 0.0
    %309 = vmatpush1.msra.mxu0 %v263
    %310 = vmatprep.subr.mxu0 0.0
    %311 = vmatpush1.msra.mxu0 %v262
    %312 = vmatprep.subr.mxu0 0.0
    %313 = vmatpush1.msra.mxu0 %v261
    %314 = vmatprep.subr.mxu0 0.0
    %315 = vmatpush1.msra.mxu0 %v260
    %316 = vmatprep.subr.mxu0 0.0
    %317 = vmatpush1.msra.mxu0 %v259
    %318 = vmatprep.subr.mxu0 0.0
    %319 = vmatpush1.msra.mxu0 %v258
    %320 = vmatprep.subr.mxu0 0.0
    %321 = vmatpush1.msra.mxu0 %v257
    %322 = vmatprep.subr.mxu0 0.0
    %323 = vmatpush1.msra.mxu0 %v256
    %324 = vmatprep.subr.mxu0 0.0
    %325 = vmatpush1.msra.mxu0 %v255
    %326 = vmatprep.subr.mxu0 0.0
    %327 = vmatpush2.msra.mxu0 %v286
    %328 = vmatprep.subr.mxu0 0.0
    %329 = vmatpush2.msra.mxu0 %v285
    %330 = vmatprep.subr.mxu0 0.0
    %331 = vmatpush2.msra.mxu0 %v284
    %332 = vmatprep.subr.mxu0 0.0
    %333 = vmatpush2.msra.mxu0 %v283
    %334 = vmatprep.subr.mxu0 0.0
    %335 = vmatpush2.msra.mxu0 %v282
    %336 = vmatprep.subr.mxu0 0.0
    %337 = vmatpush2.msra.mxu0 %v281
    %338 = vmatprep.subr.mxu0 0.0
    %339 = vmatpush2.msra.mxu0 %v280
    %340 = vmatprep.subr.mxu0 0.0
    %341 = vmatpush2.msra.mxu0 %v279
    %342 = vmatprep.subr.mxu0 0.0
    %343 = vmatpush2.msra.mxu0 %v278
    %344 = vmatprep.subr.mxu0 0.0
    %345 = vmatpush2.msra.mxu0 %v277
    %346 = vmatprep.subr.mxu0 0.0
    %347 = vmatpush2.msra.mxu0 %v276
    %348 = vmatprep.subr.mxu0 0.0
    %349 = vmatpush2.msra.mxu0 %v275
    %350 = vmatprep.subr.mxu0 0.0
    %351 = vmatpush2.msra.mxu0 %v274
    %352 = vmatprep.subr.mxu0 0.0
    %353 = vmatpush2.msra.mxu0 %v273
    %354 = vmatprep.subr.mxu0 0.0
    %355 = vmatpush2.msra.mxu0 %v272
    %356 = vmatprep.subr.mxu0 0.0
    %357 = vmatpush2.msra.mxu0 %v271
    %358 = vmatprep.mubr.f32.mxu0 %v254
    %359 = vmatmul.mubr.f32.gmra.mxu0 %v253
    %v360 = vpop.f32.mrf.mxu0
    %v361 = vadd.f32 %v292, %v360
    %v362 = vpop.f32.mrf.mxu0
    %363 = vdwg.mxu0
    %364 = vst [vmem:[#allocation7] sm:$0x7] %v361
    %v365 = vxor.u32 %v361, 2147483648
    %v366 = vmul.f32 %v365, 1.442695
    %v367 = vpow.pop %v366
    %v368 = vadd.f32 %v367, 1.0
    %v369 = vrcp.pop %v368
    %v370 = vmul.f32 1.0, %v369
    %v372 = vrot.slane %v361, 1
    %v374 = vadd.f32 %v361, %v372
    %v375 = vxor.u32 %v374, 2147483648
    %v376 = vmul.f32 %v375, 1.442695
    %v377 = vpow.pop %v376
    %v378 = vadd.f32 %v377, 1.0
    %v379 = vrcp.pop %v378
    %v380 = vmul.f32 1.0, %v379
    %v382 = vrot.slane %v380, 1
    %v384 = vsub.f32 %v370, %v382
    %v385 = vmul.f32 %v384, %v384
    %vm386 = vcmask 1040384
    %v387 = vsel %vm386, %v385, 0.0
    %388 = vadd.xlane.f32.xlu0 %v387
    %v389 = vpop.xlane.xlu0 %388
    %v390 = vmul.f32 %v389, 0.0078125
    %vm391 = vcmask 0
    %392 = vst.msk [vmem:[#allocation8] sm:$0x1] %vm391, %v390
    %v393 = vld [vmem:[#allocation5] sm:$0xff]
    %v394 = vld [vmem:[#allocation5 + $0x8] sm:$0xff]
    %v395 = vld [vmem:[#allocation5 + $0x10] sm:$0xff]
    %v396 = vld [vmem:[#allocation5 + $0x18] sm:$0xff]
    %v397 = vld [vmem:[#allocation5 + $0x20] sm:$0xff]
    %v398 = vld [vmem:[#allocation5 + $0x28] sm:$0xff]
    %v399 = vld [vmem:[#allocation5 + $0x30] sm:$0xff]
    %v400 = vld [vmem:[#allocation5 + $0x38] sm:$0xff]
    %v401 = vld [vmem:[#allocation5 + $0x40] sm:$0xff]
    %v402 = vld [vmem:[#allocation5 + $0x48] sm:$0xff]
    %v403 = vld [vmem:[#allocation5 + $0x50] sm:$0xff]
    %v404 = vld [vmem:[#allocation5 + $0x58] sm:$0xff]
    %v405 = vld [vmem:[#allocation5 + $0x60] sm:$0xff]
    %v406 = vld [vmem:[#allocation5 + $0x68] sm:$0xff]
    %v407 = vld [vmem:[#allocation5 + $0x70] sm:$0xff]
    %v408 = vld [vmem:[#allocation5 + $0x78] sm:$0xff]
    %409 = vmatprep.subr.mxu0 0.0
    %410 = vmatpush1.msra.mxu0 %v408
    %411 = vmatprep.subr.mxu0 0.0
    %412 = vmatpush1.msra.mxu0 %v407
    %413 = vmatprep.subr.mxu0 0.0
    %414 = vmatpush1.msra.mxu0 %v406
    %415 = vmatprep.subr.mxu0 0.0
    %416 = vmatpush1.msra.mxu0 %v405
    %417 = vmatprep.subr.mxu0 0.0
    %418 = vmatpush1.msra.mxu0 %v404
    %419 = vmatprep.subr.mxu0 0.0
    %420 = vmatpush1.msra.mxu0 %v403
    %421 = vmatprep.subr.mxu0 0.0
    %422 = vmatpush1.msra.mxu0 %v402
    %423 = vmatprep.subr.mxu0 0.0
    %424 = vmatpush1.msra.mxu0 %v401
    %425 = vmatprep.subr.mxu0 0.0
    %426 = vmatpush1.msra.mxu0 %v400
    %427 = vmatprep.subr.mxu0 0.0
    %428 = vmatpush1.msra.mxu0 %v399
    %429 = vmatprep.subr.mxu0 0.0
    %430 = vmatpush1.msra.mxu0 %v398
    %431 = vmatprep.subr.mxu0 0.0
    %432 = vmatpush1.msra.mxu0 %v397
    %433 = vmatprep.subr.mxu0 0.0
    %434 = vmatpush1.msra.mxu0 %v396
    %435 = vmatprep.subr.mxu0 0.0
    %436 = vmatpush1.msra.mxu0 %v395
    %437 = vmatprep.subr.mxu0 0.0
    %438 = vmatpush1.msra.mxu0 %v394
    %439 = vmatprep.subr.mxu0 0.0
    %440 = vmatpush1.msra.mxu0 %v393
    %441 = vmatprep.subr.mxu0 0.0
    %442 = vmatpush2.msra.mxu0 0.0
    %443 = vmatprep.subr.mxu0 0.0
    %444 = vmatpush2.msra.mxu0 0.0
    %445 = vmatprep.subr.mxu0 0.0
    %446 = vmatpush2.msra.mxu0 0.0
    %447 = vmatprep.subr.mxu0 0.0
    %448 = vmatpush2.msra.mxu0 0.0
    %449 = vmatprep.subr.mxu0 0.0
    %450 = vmatpush2.msra.mxu0 0.0
    %451 = vmatprep.subr.mxu0 0.0
    %452 = vmatpush2.msra.mxu0 0.0
    %453 = vmatprep.subr.mxu0 0.0
    %454 = vmatpush2.msra.mxu0 0.0
    %455 = vmatprep.subr.mxu0 0.0
    %456 = vmatpush2.msra.mxu0 0.0
    %457 = vmatprep.subr.mxu0 0.0
    %458 = vmatpush2.msra.mxu0 0.0
    %459 = vmatprep.subr.mxu0 0.0
    %460 = vmatpush2.msra.mxu0 0.0
    %461 = vmatprep.subr.mxu0 0.0
    %462 = vmatpush2.msra.mxu0 0.0
    %463 = vmatprep.subr.mxu0 0.0
    %464 = vmatpush2.msra.mxu0 0.0
    %465 = vmatprep.subr.mxu0 0.0
    %466 = vmatpush2.msra.mxu0 0.0
    %467 = vmatprep.subr.mxu0 0.0
    %468 = vmatpush2.msra.mxu0 0.0
    %469 = vmatprep.subr.mxu0 0.0
    %470 = vmatpush2.msra.mxu0 0.0
    %471 = vmatprep.subr.mxu0 0.0
    %472 = vmatpush2.msra.mxu0 0.0
    %473 = vmatprep.mubr.f32.mxu0 0.0
    %474 = vmatmul.mubr.f32.gmra.mxu0 %v370
    %v475 = vpop.f32.mrf.mxu0
    %v476 = vadd.f32 0.0, %v475
    %v477 = vpop.f32.mrf.mxu0
    %478 = vdwg.mxu0
    %v479 = vmul.f32 %v476, %v370
    %v480 = vsel %vm386, %v479, 0.0
    %481 = vadd.xlane.f32.xlu0 %v480
    %v482 = vpop.xlane.xlu0 %481
    %v483 = vmul.f32 %v482, 0.0078125
    %484 = vst.msk [vmem:[#allocation10] sm:$0x1] %vm391, %v483
    // Predicated region
    $region42: #{tpu_custom_call.1} parent=1 // pred_check
      _
    $region43: #{tpu_custom_call.1} parent=1 // pred_check_branch
      %486 = sbr.rel (0) target = $region45
    $region44: #{tpu_custom_call.1} parent=1 // pred_region
      %s488 = ssub.s32 64, 64
      %489 = vsyncadd [#allocation4], %s488
      %s491 = sshll.u32 [#allocation7], 4
      %s492 = int_to_ptr.vmem [resolvable:$true] %s491
      %494 = dma.vmem_to_hbm [thread:$0]  %s492, 64, %s8, [#allocation4]
    $region45: #{tpu_custom_call.1} parent=1 // pred_fallthru
      _
    // Predicated region
    $region46: #{tpu_custom_call.1} parent=1 // pred_check
      _
    $region47: #{tpu_custom_call.1} parent=1 // pred_check_branch
      %496 = sbr.rel (0) target = $region49
    $region48: #{tpu_custom_call.1} parent=1 // pred_region
      %s498 = ssub.s32 16, 16
      %499 = vsyncadd [#allocation9], %s498
      %s501 = sshll.u32 [#allocation8], 4
      %s502 = int_to_ptr.vmem [resolvable:$true] %s501
      %504 = dma.vmem_to_hbm [thread:$0]  %s502, 16, %s9, [#allocation9]
    $region49: #{tpu_custom_call.1} parent=1 // pred_fallthru
      _
    // Predicated region
    $region50: #{tpu_custom_call.1} parent=1 // pred_check
      _
    $region51: #{tpu_custom_call.1} parent=1 // pred_check_branch
      %506 = sbr.rel (0) target = $region53
    $region52: #{tpu_custom_call.1} parent=1 // pred_region
      %s508 = ssub.s32 16, 16
      %509 = vsyncadd [#allocation9], %s508
      %s511 = sshll.u32 [#allocation10], 4
      %s512 = int_to_ptr.vmem [resolvable:$true] %s511
      %514 = dma.vmem_to_hbm [thread:$0]  %s512, 16, %s10, [#allocation9]
    $region53: #{tpu_custom_call.1} parent=1 // pred_fallthru
      _
    // Predicated region
    $region54: #{tpu_custom_call.1} parent=1 // pred_check
      _
    $region55: #{tpu_custom_call.1} parent=1 // pred_check_branch
      %516 = sbr.rel (0) target = $region57
    $region56: #{tpu_custom_call.1} parent=1 // pred_region
      %517 = dma.done [#allocation4], 64
    $region57: #{tpu_custom_call.1} parent=1 // pred_fallthru
      _
    // Predicated region
    $region58: #{tpu_custom_call.1} parent=1 // pred_check
      _
    $region59: #{tpu_custom_call.1} parent=1 // pred_check_branch
      %519 = sbr.rel (0) target = $region61
    $region60: #{tpu_custom_call.1} parent=1 // pred_region
      %520 = dma.done [#allocation9], 16
    $region61: #{tpu_custom_call.1} parent=1 // pred_fallthru
      _
    // Predicated region
    $region62: #{tpu_custom_call.1} parent=1 // pred_check
      _
    $region63: #{tpu_custom_call.1} parent=1 // pred_check_branch
      %522 = sbr.rel (0) target = $region65
    $region64: #{tpu_custom_call.1} parent=1 // pred_region
      %523 = dma.done [#allocation9], 16
    $region65: #{tpu_custom_call.1} parent=1 // pred_fallthru
      _
    %524 = vsyncpa [#allocation3], 1
    %525 = vsyncpa [#allocation6], 1
    %526 = vsyncpa [#allocation4], 1
    %527 = vsyncpa [#allocation9], 1

</llo_original>
